<compile_context>
chip_gen: v5e
topology: v5e:2x2
jax: 0.10.0
libtpu: 0.0.40
codegen_flags: <defaults>
</compile_context>

<pallas_src>
import math

import jax
import jax.numpy as jnp
import numpy as np
from jax.experimental import pallas as pl
from jax.experimental.pallas import tpu as pltpu


def _decoder_kernel(coeff_ref, flags_ref, q_ref, lcg_ref, mask_ref, m_ref, out_ref):
    """coeff: (4,) SMEM [wc0, wc1, wg0, wg1]; flags: (2,) SMEM [is_random, random_idx];
    q: (N, D) VMEM; lcg: (3, D) VMEM rows = l, context, g; mask: (N, 1) VMEM;
    m: (D, D) VMEM fused (norm_factor * W_query @ W_key^T); out: (8, D) VMEM packed."""
    N, D = q_ref.shape

    l = lcg_ref[0:1, :]            # (1, D)
    ctx = lcg_ref[1:2, :]          # (1, D)
    g = lcg_ref[2:3, :]            # (1, D)

    wc0 = coeff_ref[0]
    wc1 = coeff_ref[1]
    wg0 = coeff_ref[2]
    wg1 = coeff_ref[3]

    # concat = W_context @ [l ; context] ; g_context = W_graph @ [g ; concat]   (VPU)
    concat = wc0 * l + wc1 * ctx                                             # (1, D)
    g_context = wg0 * g + wg1 * concat                                       # (1, D)

    # v = g_context @ (norm_factor * W_query @ W_key^T)   -- the only MXU dot
    v = jnp.dot(g_context, m_ref[...], preferred_element_type=jnp.float32)   # (1, D)

    # per-node compatibility: tanh(v . q_n) * 10, masked with -inf   (VPU mul + XLU reduce)
    q_all = q_ref[...]                                                       # (N, D)
    scores = jnp.sum(q_all * v, axis=1, keepdims=True)                       # (N, 1)
    comp = jnp.tanh(scores) * 10.0
    comp = jnp.where(mask_ref[...] <= 0.1, -jnp.inf, comp)                   # (N, 1)

    # softmax statistics over the node (sublane) axis -- no full softmax materialization
    cmax = jnp.max(comp, axis=0, keepdims=True)                              # (1, 1)
    e = jnp.exp(comp - cmax)
    ssum = jnp.sum(e, axis=0, keepdims=True)                                 # (1, 1)

    # argmax directly on comp (first maximal index); tanh/softmax are monotone so it matches
    ids = jax.lax.broadcasted_iota(jnp.int32, (N, 1), 0)
    argmax_idx = jnp.min(jnp.where(comp == cmax, ids, N), axis=0, keepdims=True)  # (1, 1)

    # runtime choice between argmax and the supplied random index (no recompile on flip)
    is_rand = jnp.full((1, 1), flags_ref[0], dtype=jnp.int32)
    rand_idx = jnp.full((1, 1), flags_ref[1], dtype=jnp.int32)
    chosen = jnp.where(is_rand != 0, rand_idx, argmax_idx)                   # (1, 1)

    # gather chosen row / probability via one-hot select + sublane reduce (no MXU, exact)
    sel = ids == chosen                                                      # (N, 1)
    c_sel = jnp.sum(jnp.where(sel, comp, 0.0), axis=0, keepdims=True)        # (1, 1)
    attn = jnp.exp(c_sel - cmax) * pl.reciprocal(ssum, approx=True)          # softmax[chosen]
    log_attn = (c_sel - cmax) - jnp.log(ssum)                                # log_softmax[chosen]
    q_max = jnp.sum(jnp.where(sel, q_all, 0.0), axis=0, keepdims=True)       # (1, D)

    # pack everything into one VMEM output slab (single writeback DMA)
    out_ref[...] = jnp.zeros_like(out_ref)
    out_ref[0:1, :] = q_max
    out_ref[1:2, :] = concat
    out_ref[2:3, 0:1] = attn
    out_ref[3:4, 0:1] = log_attn
    out_ref[4:5, 0:1] = chosen.astype(jnp.float32)


def multi_head_decoder(params, q, l, context, g, mask, is_random, random_net):
    B, N, D = q.shape
    assert B == 1, "torch module's W_context matmul only type-checks for batch_size == 1"
    key_dim = params["W_query"].shape[1]
    norm_factor = 1.0 / math.sqrt(key_dim)

    # Step-invariant fused projection: norm_factor * W_query @ W_key^T   (D, D)
    fused_w = (params["W_query"].astype(jnp.float32)
               @ params["W_key"].astype(jnp.float32).T) * norm_factor

    coeffs = jnp.concatenate([params["W_context"].reshape(-1),
                              params["W_graph"].reshape(-1)]).astype(jnp.float32)   # (4,)
    flags = jnp.concatenate([
        jnp.asarray(is_random, dtype=jnp.int32).reshape(-1)[:1],
        jnp.asarray(random_net, dtype=jnp.int32).reshape(-1)[:1]])                  # (2,)

    lcg = jnp.concatenate([l, context, g], axis=1).reshape(3, D).astype(jnp.float32)
    q2d = q.reshape(N, D).astype(jnp.float32)
    mask_col = mask.astype(jnp.float32).reshape(N, 1)

    vmem = pl.BlockSpec(memory_space=pltpu.MemorySpace.VMEM)
    smem = pl.BlockSpec(memory_space=pltpu.MemorySpace.SMEM)

    packed = pl.pallas_call(
        _decoder_kernel,
        out_shape=jax.ShapeDtypeStruct((8, D), jnp.float32),
        in_specs=[smem, smem, vmem, vmem, vmem, vmem],
        out_specs=vmem,
    )(coeffs, flags, q2d, lcg, mask_col, fused_w)

    q_max = packed[0:1, :].reshape(B, 1, D)
    concat = packed[1:2, :].reshape(B, 1, D)
    attn_max = packed[2:3, 0:1].reshape(B, 1)
    log_attn_max = packed[3:4, 0:1].reshape(B, 1)
    max_indx = packed[4:5, 0:1].astype(jnp.int32).reshape(B, 1)   # int32 vs torch int64
    mask_copy = mask  # torch.Tensor.clone(mask); JAX arrays are immutable so pass-through
    return q_max, attn_max, log_attn_max, concat, mask_copy, max_indx


def reference(params, q, l, context, g, mask, is_random, random_net):
    """Pure-JAX mirror of the torch forward (B == 1)."""
    B, N, D = q.shape
    key_dim = params["W_query"].shape[1]
    nf = 1.0 / math.sqrt(key_dim)
    lc = jnp.concatenate([l, context], axis=1).reshape(-1, D)                    # (2, D)
    concat = (params["W_context"].reshape(1, 2) @ lc).reshape(B, 1, D)
    gc = jnp.concatenate([g, concat], axis=1).reshape(-1, D)
    g_context = (params["W_graph"].reshape(1, 2) @ gc).reshape(B, 1, D)
    Q = (g_context.reshape(-1, D) @ params["W_query"]).reshape(B, 1, -1)
    K = (q.reshape(-1, D) @ params["W_key"]).reshape(B, N, -1)
    comp = jnp.tanh(nf * jnp.matmul(Q, jnp.swapaxes(K, 1, 2))) * 10.0
    mf = mask.astype(jnp.float32)[:, None, :]
    comp = jnp.where(mf <= 0.1, -jnp.inf, comp)
    sm = jax.nn.softmax(comp, axis=2)
    lsm = jax.nn.log_softmax(comp, axis=2)
    idx = jnp.argmax(sm, axis=2) if not is_random else jnp.asarray(random_net)
    i = int(np.asarray(idx).reshape(()))
    q_max = q[:, i, :][:, None, :]
    attn_max = sm[:, :, i].reshape(B, 1)
    log_attn_max = lsm[:, :, i].reshape(B, 1)
    return q_max, attn_max, log_attn_max, concat, mask, idx


def init_params(key, input_dim, key_dim):
    k1, k2, k3, k4 = jax.random.split(key, 4)
    def u(k, shape):
        stdv = 1.0 / math.sqrt(shape[-1])
        return jax.random.uniform(k, shape, jnp.float32, minval=-stdv, maxval=stdv)
    return {
        "W_context": u(k1, (1, 1, 2)),
        "W_graph":   u(k2, (1, 1, 2)),
        "W_query":   u(k3, (input_dim, key_dim)),
        "W_key":     u(k4, (input_dim, key_dim)),
    }


if __name__ == "__main__":
    B, N, D = 1, 8, 32          # batch, nodes, embed/input dim (embed_dim == input_dim == key_dim)
    key = jax.random.PRNGKey(0)
    kp, kq, kl, kc, kg = jax.random.split(key, 5)

    params = init_params(kp, D, D)
    q = jax.random.normal(kq, (B, N, D), jnp.float32)
    l = jax.random.normal(kl, (B, 1, D), jnp.float32)
    context = jax.random.normal(kc, (B, 1, D), jnp.float32)
    g = jax.random.normal(kg, (B, 1, D), jnp.float32)
    mask = jnp.array([[1., 1., 0., 1., 1., 0., 1., 1.]], dtype=jnp.float32)   # (B, N)
    random_net = jnp.array([[3]], dtype=jnp.int32)                            # (B, 1)

    for is_random in (False, True):   # same compiled kernel: is_random is runtime data now
        outs = multi_head_decoder(params, q, l, context, g, mask, is_random, random_net)
        outs = jax.block_until_ready(outs)
        q_max, attn_max, log_attn_max, concat, mask_copy, max_indx = outs

        r_qmax, r_attn, r_lattn, r_concat, r_mask, r_idx = reference(
            params, q, l, context, g, mask, is_random, random_net)

        np.testing.assert_allclose(np.asarray(q_max), np.asarray(r_qmax), rtol=1e-3, atol=1e-3)
        np.testing.assert_allclose(np.asarray(attn_max), np.asarray(r_attn), rtol=1e-3, atol=1e-3)
        np.testing.assert_allclose(np.asarray(log_attn_max), np.asarray(r_lattn), rtol=1e-3, atol=1e-3)
        np.testing.assert_allclose(np.asarray(concat), np.asarray(r_concat), rtol=1e-3, atol=1e-3)
        assert int(np.asarray(max_indx).reshape(())) == int(np.asarray(r_idx).reshape(()))
        assert np.array_equal(np.asarray(mask_copy), np.asarray(mask))

    print("KERNEL_OK")
</pallas_src>

<mosaic_0001>
module attributes {stable_mosaic.version = 11 : i64} {
  func.func @_decoder_kernel(%arg0: memref<4xf32, #tpu.memory_space<smem>>, %arg1: memref<2xi32, #tpu.memory_space<smem>>, %arg2: memref<8x32xf32, #tpu.memory_space<vmem>>, %arg3: memref<3x32xf32, #tpu.memory_space<vmem>>, %arg4: memref<8x1xf32, #tpu.memory_space<vmem>>, %arg5: memref<32x32xf32, #tpu.memory_space<vmem>>, %arg6: memref<8x32xf32, #tpu.memory_space<vmem>>) attributes {dimension_semantics = [], scalar_prefetch = 0 : i64, scratch_operands = 0 : i64, tpu.core_type = #tpu.core_type<tc>} {
    %c0 = arith.constant 0 : index
    %c0_0 = arith.constant 0 : index
    %0 = vector.load %arg3[%c0, %c0_0] : memref<3x32xf32, #tpu.memory_space<vmem>>, vector<1x32xf32>
    %c1 = arith.constant 1 : index
    %c0_1 = arith.constant 0 : index
    %1 = vector.load %arg3[%c1, %c0_1] : memref<3x32xf32, #tpu.memory_space<vmem>>, vector<1x32xf32>
    %c2 = arith.constant 2 : index
    %c0_2 = arith.constant 0 : index
    %2 = vector.load %arg3[%c2, %c0_2] : memref<3x32xf32, #tpu.memory_space<vmem>>, vector<1x32xf32>
    %c0_3 = arith.constant 0 : index
    %3 = memref.load %arg0[%c0_3] : memref<4xf32, #tpu.memory_space<smem>>
    %c1_4 = arith.constant 1 : index
    %4 = memref.load %arg0[%c1_4] : memref<4xf32, #tpu.memory_space<smem>>
    %c2_5 = arith.constant 2 : index
    %5 = memref.load %arg0[%c2_5] : memref<4xf32, #tpu.memory_space<smem>>
    %c3 = arith.constant 3 : index
    %6 = memref.load %arg0[%c3] : memref<4xf32, #tpu.memory_space<smem>>
    %7 = vector.broadcast %3 : f32 to vector<1x32xf32>
    %8 = arith.mulf %7, %0 : vector<1x32xf32>
    %9 = vector.broadcast %4 : f32 to vector<1x32xf32>
    %10 = arith.mulf %9, %1 : vector<1x32xf32>
    %11 = arith.addf %8, %10 : vector<1x32xf32>
    %12 = vector.broadcast %5 : f32 to vector<1x32xf32>
    %13 = arith.mulf %12, %2 : vector<1x32xf32>
    %14 = vector.broadcast %6 : f32 to vector<1x32xf32>
    %15 = arith.mulf %14, %11 : vector<1x32xf32>
    %16 = arith.addf %13, %15 : vector<1x32xf32>
    %c0_6 = arith.constant 0 : index
    %c0_7 = arith.constant 0 : index
    %17 = vector.load %arg5[%c0_6, %c0_7] : memref<32x32xf32, #tpu.memory_space<vmem>>, vector<32x32xf32>
    %cst = arith.constant dense<0.000000e+00> : vector<1x32xf32>
    %18 = tpu.matmul %16, %17, %cst {dimension_numbers = #tpu.dot_dimension_numbers<[1], [0], [0], [1], [0, 0, 1, 1], [], []>} : vector<1x32xf32>, vector<32x32xf32>, vector<1x32xf32> -> vector<1x32xf32>
    %c0_8 = arith.constant 0 : index
    %c0_9 = arith.constant 0 : index
    %19 = vector.load %arg2[%c0_8, %c0_9] : memref<8x32xf32, #tpu.memory_space<vmem>>, vector<8x32xf32>
    %20 = vector.broadcast %18 : vector<1x32xf32> to vector<8x32xf32>
    %21 = arith.mulf %19, %20 : vector<8x32xf32>
    %cst_10 = arith.constant dense<0.000000e+00> : vector<8xf32>
    %22 = vector.multi_reduction <add>, %21, %cst_10 [1] : vector<8x32xf32> to vector<8xf32>
    %23 = vector.shape_cast %22 : vector<8xf32> to vector<8x1xf32>
    %24 = math.tanh %23 : vector<8x1xf32>
    %cst_11 = arith.constant 1.000000e+01 : f32
    %25 = vector.broadcast %cst_11 : f32 to vector<8x1xf32>
    %26 = arith.mulf %24, %25 : vector<8x1xf32>
    %c0_12 = arith.constant 0 : index
    %c0_13 = arith.constant 0 : index
    %27 = vector.load %arg4[%c0_12, %c0_13] : memref<8x1xf32, #tpu.memory_space<vmem>>, vector<8x1xf32>
    %cst_14 = arith.constant 1.000000e-01 : f32
    %28 = vector.broadcast %cst_14 : f32 to vector<8x1xf32>
    %29 = arith.cmpf ole, %27, %28 : vector<8x1xf32>
    %cst_15 = arith.constant 0xFF800000 : f32
    %30 = vector.broadcast %cst_15 : f32 to vector<8x1xf32>
    %31 = arith.select %29, %30, %26 : vector<8x1xi1>, vector<8x1xf32>
    %cst_16 = arith.constant dense<0xFF800000> : vector<1xf32>
    %32 = vector.multi_reduction <maximumf>, %31, %cst_16 [0] : vector<8x1xf32> to vector<1xf32>
    %33 = vector.shape_cast %32 : vector<1xf32> to vector<1x1xf32>
    %34 = vector.broadcast %33 : vector<1x1xf32> to vector<8x1xf32>
    %35 = arith.subf %31, %34 : vector<8x1xf32>
    %36 = math.exp %35 : vector<8x1xf32>
    %cst_17 = arith.constant dense<0.000000e+00> : vector<1xf32>
    %37 = vector.multi_reduction <add>, %36, %cst_17 [0] : vector<8x1xf32> to vector<1xf32>
    %38 = vector.shape_cast %37 : vector<1xf32> to vector<1x1xf32>
    %39 = tpu.iota {dimensions = array<i32: 0>} : vector<8x1xi32>
    %40 = vector.broadcast %33 : vector<1x1xf32> to vector<8x1xf32>
    %41 = arith.cmpf oeq, %31, %40 : vector<8x1xf32>
    %c8_i32 = arith.constant 8 : i32
    %42 = vector.broadcast %c8_i32 : i32 to vector<8x1xi32>
    %43 = arith.select %41, %39, %42 : vector<8x1xi1>, vector<8x1xi32>
    %cst_18 = arith.constant dense<2147483647> : vector<1xi32>
    %44 = vector.multi_reduction <minsi>, %43, %cst_18 [0] : vector<8x1xi32> to vector<1xi32>
    %45 = vector.shape_cast %44 : vector<1xi32> to vector<1x1xi32>
    %c0_19 = arith.constant 0 : index
    %46 = memref.load %arg1[%c0_19] : memref<2xi32, #tpu.memory_space<smem>>
    %47 = vector.broadcast %46 : i32 to vector<1x1xi32>
    %c1_20 = arith.constant 1 : index
    %48 = memref.load %arg1[%c1_20] : memref<2xi32, #tpu.memory_space<smem>>
    %49 = vector.broadcast %48 : i32 to vector<1x1xi32>
    %c0_i32 = arith.constant 0 : i32
    %50 = vector.broadcast %c0_i32 : i32 to vector<1x1xi32>
    %51 = arith.cmpi ne, %47, %50 : vector<1x1xi32>
    %52 = arith.select %51, %49, %45 : vector<1x1xi1>, vector<1x1xi32>
    %53 = vector.broadcast %52 : vector<1x1xi32> to vector<8x1xi32>
    %54 = arith.cmpi eq, %39, %53 : vector<8x1xi32>
    %cst_21 = arith.constant 0.000000e+00 : f32
    %55 = vector.broadcast %cst_21 : f32 to vector<8x1xf32>
    %56 = arith.select %54, %31, %55 : vector<8x1xi1>, vector<8x1xf32>
    %cst_22 = arith.constant dense<0.000000e+00> : vector<1xf32>
    %57 = vector.multi_reduction <add>, %56, %cst_22 [0] : vector<8x1xf32> to vector<1xf32>
    %58 = vector.shape_cast %57 : vector<1xf32> to vector<1x1xf32>
    %59 = arith.subf %58, %33 : vector<1x1xf32>
    %60 = math.exp %59 : vector<1x1xf32>
    %61 = tpu.reciprocal %38 {approx = true} : vector<1x1xf32> -> vector<1x1xf32>
    %62 = arith.mulf %60, %61 : vector<1x1xf32>
    %63 = arith.subf %58, %33 : vector<1x1xf32>
    %64 = math.log %38 : vector<1x1xf32>
    %65 = arith.subf %63, %64 : vector<1x1xf32>
    %cst_23 = arith.constant 0.000000e+00 : f32
    %66 = vector.shape_cast %54 : vector<8x1xi1> to vector<8x1xi1>
    %67 = vector.broadcast %66 : vector<8x1xi1> to vector<8x32xi1>
    %68 = vector.broadcast %cst_23 : f32 to vector<8x32xf32>
    %69 = arith.select %67, %19, %68 : vector<8x32xi1>, vector<8x32xf32>
    %cst_24 = arith.constant dense<0.000000e+00> : vector<32xf32>
    %70 = vector.multi_reduction <add>, %69, %cst_24 [0] : vector<8x32xf32> to vector<32xf32>
    %71 = vector.shape_cast %70 : vector<32xf32> to vector<1x32xf32>
    %cst_25 = arith.constant 0.000000e+00 : f32
    %72 = vector.broadcast %cst_25 : f32 to vector<8x32xf32>
    %c0_26 = arith.constant 0 : index
    %c0_27 = arith.constant 0 : index
    %73 = vector.load %arg6[%c0_26, %c0_27] : memref<8x32xf32, #tpu.memory_space<vmem>>, vector<8x32xf32>
    tpu.vector_store %arg6[%c0_26, %c0_27], %72 {strides = array<i32>} : memref<8x32xf32, #tpu.memory_space<vmem>>, vector<8x32xf32>,
    %c0_28 = arith.constant 0 : index
    %c0_29 = arith.constant 0 : index
    %74 = vector.load %arg6[%c0_28, %c0_29] : memref<8x32xf32, #tpu.memory_space<vmem>>, vector<1x32xf32>
    tpu.vector_store %arg6[%c0_28, %c0_29], %71 {strides = array<i32>} : memref<8x32xf32, #tpu.memory_space<vmem>>, vector<1x32xf32>,
    %c1_30 = arith.constant 1 : index
    %c0_31 = arith.constant 0 : index
    %75 = vector.load %arg6[%c1_30, %c0_31] : memref<8x32xf32, #tpu.memory_space<vmem>>, vector<1x32xf32>
    tpu.vector_store %arg6[%c1_30, %c0_31], %11 {strides = array<i32>} : memref<8x32xf32, #tpu.memory_space<vmem>>, vector<1x32xf32>,
    %c2_32 = arith.constant 2 : index
    %c0_33 = arith.constant 0 : index
    %76 = vector.load %arg6[%c2_32, %c0_33] : memref<8x32xf32, #tpu.memory_space<vmem>>, vector<1x1xf32>
    tpu.vector_store %arg6[%c2_32, %c0_33], %62 {strides = array<i32>} : memref<8x32xf32, #tpu.memory_space<vmem>>, vector<1x1xf32>,
    %c3_34 = arith.constant 3 : index
    %c0_35 = arith.constant 0 : index
    %77 = vector.load %arg6[%c3_34, %c0_35] : memref<8x32xf32, #tpu.memory_space<vmem>>, vector<1x1xf32>
    tpu.vector_store %arg6[%c3_34, %c0_35], %65 {strides = array<i32>} : memref<8x32xf32, #tpu.memory_space<vmem>>, vector<1x1xf32>,
    %78 = arith.sitofp %52 : vector<1x1xi32> to vector<1x1xf32>
    %c4 = arith.constant 4 : index
    %c0_36 = arith.constant 0 : index
    %79 = vector.load %arg6[%c4, %c0_36] : memref<8x32xf32, #tpu.memory_space<vmem>>, vector<1x1xf32>
    tpu.vector_store %arg6[%c4, %c0_36], %78 {strides = array<i32>} : memref<8x32xf32, #tpu.memory_space<vmem>>, vector<1x1xf32>,
    return
  }
}

</mosaic_0001>

<llo_original>
// kernel: tpu_custom_call.1
$region0: #{tpu_custom_call.1}
  #allocation0 [shape = 'u32[]', space=smem, size = 0x4, offset = 0x4, fixed_abs, tag = 'smem constant byte address 0x4 - core index']
  #allocation1 [shape = 'u32[72,128]{1,0:T(1,128)}', space=vmem, size = 0x9000, scoped, tag = 'internal scratch']
  %s0 = inlined_call_operand.vmem [shape: f32[4], index: 0, kind: input, shape index: {}]
  %s1 = inlined_call_operand.hbm [shape: s32[2], index: 1, kind: input, shape index: {}]
  %s2 = inlined_call_operand.vmem [shape: f32[8,32], index: 2, kind: input, shape index: {}]
  %s3 = inlined_call_operand.hbm [shape: f32[3,32], index: 3, kind: input, shape index: {}]
  %s4 = inlined_call_operand.vmem [shape: f32[8,1], index: 4, kind: input, shape index: {}]
  %s5 = inlined_call_operand.hbm [shape: f32[32,32], index: 5, kind: input, shape index: {}]
  %s6 = inlined_call_operand.hbm [shape: f32[8,32], index: 6, kind: output, shape index: {}]
  %s7 = sld [smem:[#allocation0]]
  $region50: #{tpu_custom_call.1} parent=0
    _
  %s9 = ssub.s32 1, %s7
  %s10 = scalar_select 0, %s9, %s7
  $region1: #{tpu_custom_call.1} parent=0
    #allocation2 [shape = 'u8[512]{0}', space=smem, size = 0x200, scoped, tag = 'input window, operand 0, single buffered']
    #allocation3 [shape = 's32[1]{0}', space=sflag, size = 0x4, scoped, tag = 'scoped memory for tpu_custom_call.1']
    #allocation4 [shape = 's32[1]{0}', space=sflag, size = 0x4, scoped, tag = 'scoped memory for tpu_custom_call.1']
    #allocation5 [shape = 's32[1]{0}', space=sflag, size = 0x4, scoped, tag = 'scoped memory for tpu_custom_call.1']
    #allocation6 [shape = 's32[1]{0}', space=sflag, size = 0x4, scoped, tag = 'scoped memory for tpu_custom_call.1']
    #allocation7 [shape = 'u8[512]{0}', space=smem, size = 0x200, scoped, tag = 'input window, operand 1, single buffered']
    #allocation8 [shape = 'u8[2048]{0}', space=vmem, size = 0x800, scoped, tag = 'input window, operand 3, single buffered']
    #allocation9 [shape = 'u8[16384]{0}', space=vmem, size = 0x4000, scoped, tag = 'input window, operand 5, single buffered']
    #allocation10 [shape = 's32[1]{0}', space=sflag, size = 0x4, scoped, tag = 'scoped memory for tpu_custom_call.1']
    #allocation11 [shape = 'u8[4096]{0}', space=vmem, size = 0x1000, scoped, tag = 'output window, operand 0, single buffered']
    %11 = vsyncpa [#allocation6], 0
    %12 = vsyncpa [#allocation5], 0
    %13 = vsyncpa [#allocation3], 0
    %14 = vsyncpa [#allocation10], 0
    %15 = vsyncpa [#allocation4], 0
    // Predicated region
    $region2: #{tpu_custom_call.1} parent=1 // pred_check
      _
    $region3: #{tpu_custom_call.1} parent=1 // pred_check_branch
      %17 = sbr.rel (0) target = $region5
    $region4: #{tpu_custom_call.1} parent=1 // pred_region
      %19 = vsyncadd [#allocation6], 0
      %s21 = sshll.u32 %s0, 4
      %s22 = int_to_ptr.vmem [resolvable:$true] %s21
      %24 = dma.vmem_to_smem %s22, 16, [#allocation2], [#allocation6]
    $region5: #{tpu_custom_call.1} parent=1 // pred_fallthru
      _
    // Predicated region
    $region6: #{tpu_custom_call.1} parent=1 // pred_check
      _
    $region7: #{tpu_custom_call.1} parent=1 // pred_check_branch
      %26 = sbr.rel (0) target = $region9
    $region8: #{tpu_custom_call.1} parent=1 // pred_region
      %28 = vsyncadd [#allocation5], 0
      %s30 = sshll.u32 %s1, 4
      %s31 = int_to_ptr.hbm [resolvable:$true] %s30
      %33 = dma.hbm_to_smem %s31, 16, [#allocation7], [#allocation5]
    $region9: #{tpu_custom_call.1} parent=1 // pred_fallthru
      _
    // Predicated region
    $region10: #{tpu_custom_call.1} parent=1 // pred_check
      _
    $region11: #{tpu_custom_call.1} parent=1 // pred_check_branch
      %35 = sbr.rel (0) target = $region13
    $region12: #{tpu_custom_call.1} parent=1 // pred_region
      _
    $region13: #{tpu_custom_call.1} parent=1 // pred_fallthru
      _
    // Predicated region
    $region14: #{tpu_custom_call.1} parent=1 // pred_check
      _
    $region15: #{tpu_custom_call.1} parent=1 // pred_check_branch
      %37 = sbr.rel (0) target = $region17
    $region16: #{tpu_custom_call.1} parent=1 // pred_region
      %39 = vsyncadd [#allocation3], 0
      %s41 = sshll.u32 %s3, 4
      %s42 = int_to_ptr.hbm [resolvable:$true] %s41
      %s43 = sshll.u32 [#allocation8], 4
      %s44 = int_to_ptr.vmem [resolvable:$true] %s43
      %46 = dma.hbm_to_vmem [thread:$0]  %s42, 64, %s44, [#allocation3]
    $region17: #{tpu_custom_call.1} parent=1 // pred_fallthru
      _
    // Predicated region
    $region18: #{tpu_custom_call.1} parent=1 // pred_check
      _
    $region19: #{tpu_custom_call.1} parent=1 // pred_check_branch
      %48 = sbr.rel (0) target = $region21
    $region20: #{tpu_custom_call.1} parent=1 // pred_region
      _
    $region21: #{tpu_custom_call.1} parent=1 // pred_fallthru
      _
    // Predicated region
    $region22: #{tpu_custom_call.1} parent=1 // pred_check
      _
    $region23: #{tpu_custom_call.1} parent=1 // pred_check_branch
      %50 = sbr.rel (0) target = $region25
    $region24: #{tpu_custom_call.1} parent=1 // pred_region
      %52 = vsyncadd [#allocation10], 0
      %s53 = sshll.u32 %s5, 4
      %s54 = int_to_ptr.hbm [resolvable:$true] %s53
      %s55 = sshll.u32 [#allocation9], 4
      %s56 = int_to_ptr.vmem [resolvable:$true] %s55
      %61 = dma.hbm_to_vmem [thread:$0]  %s54, 512, %s56, [#allocation10], 128, 128, 8
    $region25: #{tpu_custom_call.1} parent=1 // pred_fallthru
      _
    // Predicated region
    $region26: #{tpu_custom_call.1} parent=1 // pred_check
      _
    $region27: #{tpu_custom_call.1} parent=1 // pred_check_branch
      %63 = sbr.rel (0) target = $region29
    $region28: #{tpu_custom_call.1} parent=1 // pred_region
      %65 = dma.done [#allocation6], 16
    $region29: #{tpu_custom_call.1} parent=1 // pred_fallthru
      _
    // Predicated region
    $region30: #{tpu_custom_call.1} parent=1 // pred_check
      _
    $region31: #{tpu_custom_call.1} parent=1 // pred_check_branch
      %67 = sbr.rel (0) target = $region33
    $region32: #{tpu_custom_call.1} parent=1 // pred_region
      %69 = dma.done [#allocation5], 16
    $region33: #{tpu_custom_call.1} parent=1 // pred_fallthru
      _
    // Predicated region
    $region34: #{tpu_custom_call.1} parent=1 // pred_check
      _
    $region35: #{tpu_custom_call.1} parent=1 // pred_check_branch
      %71 = sbr.rel (0) target = $region37
    $region36: #{tpu_custom_call.1} parent=1 // pred_region
      %73 = dma.done [#allocation3], 64
    $region37: #{tpu_custom_call.1} parent=1 // pred_fallthru
      _
    // Predicated region
    $region38: #{tpu_custom_call.1} parent=1 // pred_check
      _
    $region39: #{tpu_custom_call.1} parent=1 // pred_check_branch
      %75 = sbr.rel (0) target = $region41
    $region40: #{tpu_custom_call.1} parent=1 // pred_region
      %77 = dma.done [#allocation10], 512
    $region41: #{tpu_custom_call.1} parent=1 // pred_fallthru
      _
    %78 = sfence
    %v79 = vld [vmem:[#allocation8] sm:$0x1]
    %v80 = vld [vmem:[#allocation8 + $0x1] sm:$0x1]
    %v81 = vld [vmem:[#allocation8 + $0x2] sm:$0x1]
    %s82 = sld [smem:[#allocation2]]
    %s83 = sld [smem:[#allocation2 + $0x1]]
    %s84 = sld [smem:[#allocation2 + $0x2]]
    %s85 = sld [smem:[#allocation2 + $0x3]]
    %v86 = vstv %s82
    %v87 = vmul.f32 %v86, %v79
    %v88 = vstv %s83
    %v89 = vmul.f32 %v88, %v80
    %v90 = vadd.f32 %v87, %v89
    %v91 = vstv %s84
    %v92 = vmul.f32 %v91, %v81
    %v93 = vstv %s85
    %v94 = vmul.f32 %v93, %v90
    %v95 = vadd.f32 %v92, %v94
    %v96 = vld [vmem:[#allocation9] sm:$0xff]
    %v97 = vld [vmem:[#allocation9 + $0x8] sm:$0xff]
    %v98 = vld [vmem:[#allocation9 + $0x10] sm:$0xff]
    %v99 = vld [vmem:[#allocation9 + $0x18] sm:$0xff]
    %vm100 = vcmask 261120
    %v102 = vsel %vm100, %v95, 0
    %104 = vmatpush.msra.mxu0 0.0
    %105 = vmatpush.msra.mxu0 0.0
    %106 = vmatpush.msra.mxu0 0.0
    %107 = vmatpush.msra.mxu0 0.0
    %108 = vmatpush.msra.mxu0 0.0
    %109 = vmatpush.msra.mxu0 0.0
    %110 = vmatpush.msra.mxu0 0.0
    %111 = vmatpush.msra.mxu0 0.0
    %112 = vmatpush.msra.mxu0 0.0
    %113 = vmatpush.msra.mxu0 0.0
    %114 = vmatpush.msra.mxu0 0.0
    %115 = vmatpush.msra.mxu0 0.0
    %116 = vmatpush.msra.mxu0 %v99
    %117 = vmatpush.msra.mxu0 %v98
    %118 = vmatpush.msra.mxu0 %v97
    %119 = vmatpush.msra.mxu0 %v96
    %120 = vmatmul.f32.gmra.mxu0 %v102
    %v121 = vpop.f32.mrf.mxu0
    %v122 = vadd.f32 0.0, %v121
    %123 = vdwg.mxu0
    %v124 = vld [vmem:[%s2] sm:$0xff]
    %v125 = vperm.slane %v122, 0
    %v126 = vmul.f32 %v124, %v125
    %v127 = vsel %vm100, %v126, 0.0
    %128 = vadd.xlane.f32.xlu0 %v127
    %v129 = vpop.xlane.xlu0 %128
    %v130 = vtanh.pop %v129
    %v131 = vmul.f32 %v130, 10.0
    %v132 = vld [vmem:[%s4] sm:$0xff]
    %vm133 = vcmp.le.f32.partialorder %v132, 0.1
    %v134 = vsel %vm133, -inf, %v131
    %vm135 = vcmask 7168
    %v136 = vsel %vm135, %v134, -inf
    %v137 = vrot.slane %v136, 4
    %v138 = vmax.f32 %v136, %v137
    %v139 = vrot.slane %v138, 2
    %v140 = vmax.f32 %v138, %v139
    %v141 = vrot.slane %v140, 1
    %v142 = vmax.f32 %v140, %v141
    %v143 = vsub.f32 %v134, %v142
    %v144 = vmul.f32 %v143, 1.442695
    %v145 = vpow.pop %v144
    %v146 = vsel %vm135, %v145, 0.0
    %v147 = vrot.slane %v146, 4
    %v148 = vadd.f32 %v146, %v147
    %v149 = vrot.slane %v148, 2
    %v150 = vadd.f32 %v148, %v149
    %v151 = vrot.slane %v150, 1
    %v152 = vadd.f32 %v150, %v151
    %v153 = vlaneseq
    %v154 = vshrl.u32 %v153, 7
    %vm155 = vcmp.eq.f32.partialorder %v134, %v142
    %v156 = vsel %vm155, %v154, 8
    %v157 = vsel %vm135, %v156, 2147483647
    %v158 = vrot.slane %v157, 4
    %vm159 = vcmp.lt.s32.totalorder %v157, %v158
    %v160 = vsel %vm159, %v157, %v158
    %v161 = vrot.slane %v160, 2
    %vm162 = vcmp.lt.s32.totalorder %v160, %v161
    %v163 = vsel %vm162, %v160, %v161
    %v164 = vrot.slane %v163, 1
    %vm165 = vcmp.lt.s32.totalorder %v163, %v164
    %v166 = vsel %vm165, %v163, %v164
    %s167 = sld [smem:[#allocation7]]
    %v168 = vstv %s167
    %s169 = sld [smem:[#allocation7 + $0x1]]
    %v170 = vstv %s169
    %vm171 = vcmp.ne.s32.totalorder %v168, 0
    %v172 = vsel %vm171, %v170, %v166
    %vm173 = vcmp.eq.s32.totalorder %v154, %v172
    %v174 = vsel %vm173, %v134, 0.0
    %v175 = vsel %vm135, %v174, 0.0
    %v176 = vrot.slane %v175, 4
    %v177 = vadd.f32 %v175, %v176
    %v178 = vrot.slane %v177, 2
    %v179 = vadd.f32 %v177, %v178
    %v180 = vrot.slane %v179, 1
    %v181 = vadd.f32 %v179, %v180
    %v182 = vsub.f32 %v181, %v142
    %v183 = vmul.f32 %v182, 1.442695
    %v184 = vpow.pop %v183
    %v185 = vrcp.pop %v152
    %v186 = vmul.f32 %v184, %v185
    %v187 = vlog2.pop %v152
    %v188 = vmul.f32 %v187, 0.6931472
    %v189 = vsub.f32 %v182, %v188
    %v190 = vsel %vm173, 1, 0
    %191 = vset.pattern.permute.xlu0 0
    %192 = vperm.xlu0 %191, %v190
    %v193 = vpop.permute.xlu0 %192
    %vm194 = vcmp.eq.s32.totalorder %v193, 1
    %v195 = vsel %vm194, %v124, 0.0
    %v196 = vsel %vm100, %v195, 0.0
    %v197 = vrot.slane %v196, 4
    %v198 = vadd.f32 %v196, %v197
    %v199 = vrot.slane %v198, 2
    %v200 = vadd.f32 %v198, %v199
    %v201 = vrot.slane %v200, 1
    %v202 = vadd.f32 %v200, %v201
    %203 = vst.msk [vmem:[#allocation11] sm:$0xff] %vm100, 0.0
    %vm204 = vcmask 253952
    %205 = vst.msk [vmem:[#allocation11] sm:$0x1] %vm204, %v202
    %206 = vst.msk [vmem:[#allocation11 + $0x1] sm:$0x1] %vm204, %v90
    %vm207 = vcmask 0
    %208 = vst.msk [vmem:[#allocation11 + $0x2] sm:$0x1] %vm207, %v186
    %209 = vst.msk [vmem:[#allocation11 + $0x3] sm:$0x1] %vm207, %v189
    %v210 = vcvt.s32.f32 %v172
    %211 = vst.msk [vmem:[#allocation11 + $0x4] sm:$0x1] %vm207, %v210
    // Predicated region
    $region42: #{tpu_custom_call.1} parent=1 // pred_check
      _
    $region43: #{tpu_custom_call.1} parent=1 // pred_check_branch
      %213 = sbr.rel (0) target = $region45
    $region44: #{tpu_custom_call.1} parent=1 // pred_region
      %215 = vsyncadd [#allocation4], 0
      %s217 = sshll.u32 [#allocation11], 4
      %s218 = int_to_ptr.vmem [resolvable:$true] %s217
      %s219 = sshll.u32 %s6, 4
      %s220 = int_to_ptr.hbm [resolvable:$true] %s219
      %222 = dma.vmem_to_hbm [thread:$0]  %s218, 128, %s220, [#allocation4]
    $region45: #{tpu_custom_call.1} parent=1 // pred_fallthru
      _
    // Predicated region
    $region46: #{tpu_custom_call.1} parent=1 // pred_check
      _
    $region47: #{tpu_custom_call.1} parent=1 // pred_check_branch
      %224 = sbr.rel (0) target = $region49
    $region48: #{tpu_custom_call.1} parent=1 // pred_region
      %226 = dma.done [#allocation4], 128
    $region49: #{tpu_custom_call.1} parent=1 // pred_fallthru
      _
    %227 = vsyncpa [#allocation3], 1
    %228 = vsyncpa [#allocation10], 1
    %229 = vsyncpa [#allocation4], 1
    %230 = vsyncpa [#allocation5], 1
    %231 = vsyncpa [#allocation6], 1

</llo_original>
